<compile_context>
chip_gen: v7x
topology: tpu7x:2x2x1
jax: 0.10.0
libtpu: 0.0.40
codegen_flags: <defaults>
</compile_context>

<pallas_src>
import jax
import jax.numpy as jnp
import numpy as np
from jax.experimental import pallas as pl
from jax.experimental.pallas import tpu as pltpu


def make_residual_block_kernel(C, H, W):
    HW = H * W
    EPS = 1e-5                      # torch.nn.InstanceNorm2d default eps
    INV_HW = 1.0 / float(HW)
    assert H >= 2 and W >= 2, "ReflectionPad2d(1) requires H, W >= 2"

    def kernel(strength_ref, x_ref,
               w1_ref, g1_ref, be1_ref,
               w2_ref, g2_ref, be2_ref,
               o_ref):
        # ---- lane-only boundary masks (1, HW); broadcast over channels ----
        p = jax.lax.broadcasted_iota(jnp.int32, (1, HW), 1)   # flat idx y*W + x
        if (W & (W - 1)) == 0:
            col = jnp.bitwise_and(p, W - 1)
        else:
            col = p % W
        at_left = col == 0
        at_right = col == W - 1
        at_top = p < W
        at_bottom = p >= HW - W

        def shift(a, d):
            # b[:, q] = a[:, (q + d) % HW]  (cyclic; boundaries fixed by where)
            return pltpu.roll(a, (-d) % HW, axis=1)

        def conv3x3(a, w_ref):
            # Reflection-padded 3x3 conv as ONE stacked-K MXU matmul:
            #   (Cout, 9*Cin) bf16  x  (9*Cin, HW) bf16  ->  (Cout, HW) f32
            # K ordering matches prep_w: k = (dy*3 + dx) * Cin + ci.
            p1, m1 = shift(a, 1), shift(a, -1)
            h = (jnp.where(at_left, p1, m1),      # dx=0 -> x-1 (reflected at x==0)
                 a,                               # dx=1
                 jnp.where(at_right, m1, p1))     # dx=2 -> x+1 (reflected at x==W-1)
            taps = [None] * 9
            for dx in range(3):
                pw, mw = shift(h[dx], W), shift(h[dx], -W)
                taps[0 * 3 + dx] = jnp.where(at_top, pw, mw)      # dy=0 -> y-1
                taps[1 * 3 + dx] = h[dx]                          # dy=1
                taps[2 * 3 + dx] = jnp.where(at_bottom, mw, pw)   # dy=2 -> y+1
            stacked = jnp.concatenate(taps, axis=0).astype(jnp.bfloat16)  # (9C, HW)
            return jnp.dot(w_ref[...], stacked,
                           preferred_element_type=jnp.float32)

        def instance_norm(a, g_ref, b_ref):
            # biased variance, per-channel (lane-axis reduction), affine=True
            mean = jnp.sum(a, axis=1, keepdims=True) * INV_HW
            cen = a - mean
            var = jnp.sum(cen * cen, axis=1, keepdims=True) * INV_HW
            return cen * jax.lax.rsqrt(var + EPS) * g_ref[...] + b_ref[...]

        strength = strength_ref[0]            # scalar gate, precomputed in wrapper
        x = x_ref[0].astype(jnp.float32)      # (C, HW) lane-dense slab

        # conv1 -> IN1 -> ReLU   (conv bias omitted: cancelled by IN mean-sub)
        y = conv3x3(x, w1_ref)
        y = jnp.maximum(instance_norm(y, g1_ref, be1_ref), 0.0)
        # conv2 -> IN2
        y = conv3x3(y, w2_ref)
        y = instance_norm(y, g2_ref, be2_ref)

        # strength-gated residual add (full-precision skip path, lane-dense store)
        o_ref[0] = (strength * y + x).astype(o_ref.dtype)

    return kernel


def residual_block_forward(x, style_strength, params):
    """x: (B, C, H, W) float32, style_strength: shape-(1,) float32."""
    B, C, H, W = x.shape
    HW = H * W
    kernel = make_residual_block_kernel(C, H, W)

    x_flat = x.reshape(B, C, HW)

    def prep_w(w_oihw):
        # PyTorch OIHW (co,ci,kh,kw) -> (co,kh,kw,ci) -> (Cout, 9*Cin) bf16.
        # K index = (kh*3 + kw)*Cin + ci, matching the kernel's tap stacking.
        return (jnp.transpose(w_oihw, (0, 2, 3, 1))
                .reshape(C, 9 * C)
                .astype(jnp.bfloat16))

    def prep_c(v):
        return v.reshape(C, 1).astype(jnp.float32)

    # strength = 2*|style*layer_strength| / (1 + |style*layer_strength|), once.
    s = style_strength.astype(jnp.float32) * params["ls"].astype(jnp.float32)
    strength = (2.0 * jnp.abs(s) / (1.0 + jnp.abs(s))).reshape(1)

    act_spec = pl.BlockSpec((1, C, HW), lambda b: (b, 0, 0))       # lane-dense
    w_spec = pl.BlockSpec((C, 9 * C), lambda b: (0, 0))            # resident weights
    c_spec = pl.BlockSpec((C, 1), lambda b: (0, 0))                # per-channel affine
    smem = pl.BlockSpec(memory_space=pltpu.MemorySpace.SMEM)

    out_flat = pl.pallas_call(
        kernel,
        out_shape=jax.ShapeDtypeStruct((B, C, HW), x.dtype),
        grid=(B,),
        in_specs=[smem, act_spec,
                  w_spec, c_spec, c_spec,
                  w_spec, c_spec, c_spec],
        out_specs=act_spec,
        compiler_params=pltpu.CompilerParams(
            dimension_semantics=("parallel",)),   # shard batch across TCs on v7x
    )(strength, x_flat,
      prep_w(params["w1"]), prep_c(params["g1"]), prep_c(params["be1"]),
      prep_w(params["w2"]), prep_c(params["g2"]), prep_c(params["be2"]))

    return out_flat.reshape(B, C, H, W)


def residual_block_reference(x, style_strength, params):
    """Pure-JAX f32 reference mirroring the PyTorch forward (biases included)."""
    def conv(y, w, b):
        yp = jnp.pad(y, ((0, 0), (0, 0), (1, 1), (1, 1)), mode="reflect")
        out = jax.lax.conv_general_dilated(
            yp, w, window_strides=(1, 1), padding="VALID",
            dimension_numbers=("NCHW", "OIHW", "NCHW"))
        return out + b[None, :, None, None]

    def inorm(y, g, be):
        m = jnp.mean(y, axis=(2, 3), keepdims=True)
        v = jnp.mean((y - m) ** 2, axis=(2, 3), keepdims=True)
        return (y - m) * jax.lax.rsqrt(v + 1e-5) * g[None, :, None, None] \
            + be[None, :, None, None]

    s = style_strength[0] * params["ls"][0]
    strength = 2.0 * jnp.abs(s) / (1.0 + jnp.abs(s))
    out = jax.nn.relu(inorm(conv(x, params["w1"], params["b1"]),
                            params["g1"], params["be1"]))
    out = inorm(conv(out, params["w2"], params["b2"]),
                params["g2"], params["be2"])
    return strength * out + x


if __name__ == "__main__":
    B, C, H, W = 2, 4, 16, 16
    key = jax.random.PRNGKey(0)
    keys = jax.random.split(key, 10)

    x = jax.random.normal(keys[0], (B, C, H, W), dtype=jnp.float32)
    style_strength = jnp.array([0.7], dtype=jnp.float32)

    params = {
        # conv weights in PyTorch OIHW layout: (Cout, Cin, kH, kW)
        "w1": 0.1 * jax.random.normal(keys[1], (C, C, 3, 3), dtype=jnp.float32),
        "b1": 0.1 * jax.random.normal(keys[2], (C,), dtype=jnp.float32),
        "g1": 1.0 + 0.1 * jax.random.normal(keys[3], (C,), dtype=jnp.float32),
        "be1": 0.1 * jax.random.normal(keys[4], (C,), dtype=jnp.float32),
        "w2": 0.1 * jax.random.normal(keys[5], (C, C, 3, 3), dtype=jnp.float32),
        "b2": 0.1 * jax.random.normal(keys[6], (C,), dtype=jnp.float32),
        "g2": 1.0 + 0.1 * jax.random.normal(keys[7], (C,), dtype=jnp.float32),
        "be2": 0.1 * jax.random.normal(keys[8], (C,), dtype=jnp.float32),
        # layer_strength param initialized to 1.0 as in the module's __init__
        "ls": jnp.array([1.0], dtype=jnp.float32),
    }

    out = residual_block_forward(x, style_strength, params)
    out = jax.block_until_ready(out)

    ref = jax.block_until_ready(residual_block_reference(x, style_strength, params))
    # Tolerance covers bf16 MXU operands (per-review opt) through two conv +
    # InstanceNorm layers vs. the full-f32 XLA reference; InstanceNorm
    # renormalization keeps the drift to a few 1e-3 per element.
    np.testing.assert_allclose(np.asarray(out), np.asarray(ref), rtol=3e-2, atol=3e-2)

    print("KERNEL_OK")
</pallas_src>

<mosaic_0001>
module attributes {stable_mosaic.version = 11 : i64} {
  func.func @kernel(%arg0: i32, %arg1: memref<1xf32, #tpu.memory_space<smem>>, %arg2: memref<1x4x256xf32, #tpu.memory_space<vmem>>, %arg3: memref<4x36xbf16, #tpu.memory_space<vmem>>, %arg4: memref<4x1xf32, #tpu.memory_space<vmem>>, %arg5: memref<4x1xf32, #tpu.memory_space<vmem>>, %arg6: memref<4x36xbf16, #tpu.memory_space<vmem>>, %arg7: memref<4x1xf32, #tpu.memory_space<vmem>>, %arg8: memref<4x1xf32, #tpu.memory_space<vmem>>, %arg9: memref<1x4x256xf32, #tpu.memory_space<vmem>>) attributes {dimension_semantics = [#tpu.dimension_semantics<parallel>], iteration_bounds = array<i64: 2>, scalar_prefetch = 0 : i64, scratch_operands = 0 : i64, tpu.core_type = #tpu.core_type<tc>, window_params = [{transform_indices = @transform_0, window_bounds = array<i64: 1>}, {transform_indices = @transform_1, window_bounds = array<i64: 1, 4, 256>}, {pipeline_mode = #tpu.pipeline_mode<synchronous>, transform_indices = @transform_2, window_bounds = array<i64: 4, 36>}, {pipeline_mode = #tpu.pipeline_mode<synchronous>, transform_indices = @transform_3, window_bounds = array<i64: 4, 1>}, {pipeline_mode = #tpu.pipeline_mode<synchronous>, transform_indices = @transform_4, window_bounds = array<i64: 4, 1>}, {pipeline_mode = #tpu.pipeline_mode<synchronous>, transform_indices = @transform_5, window_bounds = array<i64: 4, 36>}, {pipeline_mode = #tpu.pipeline_mode<synchronous>, transform_indices = @transform_6, window_bounds = array<i64: 4, 1>}, {pipeline_mode = #tpu.pipeline_mode<synchronous>, transform_indices = @transform_7, window_bounds = array<i64: 4, 1>}, {transform_indices = @transform_8, window_bounds = array<i64: 1, 4, 256>}]} {
    %0 = tpu.iota {dimensions = array<i32: 1>} : vector<1x256xi32>
    %c15_i32 = arith.constant 15 : i32
    %1 = vector.broadcast %c15_i32 : i32 to vector<1x256xi32>
    %2 = arith.andi %0, %1 : vector<1x256xi32>
    %c0_i32 = arith.constant 0 : i32
    %3 = vector.broadcast %c0_i32 : i32 to vector<1x256xi32>
    %4 = arith.cmpi eq, %2, %3 : vector<1x256xi32>
    %c15_i32_0 = arith.constant 15 : i32
    %5 = vector.broadcast %c15_i32_0 : i32 to vector<1x256xi32>
    %6 = arith.cmpi eq, %2, %5 : vector<1x256xi32>
    %c16_i32 = arith.constant 16 : i32
    %7 = vector.broadcast %c16_i32 : i32 to vector<1x256xi32>
    %8 = arith.cmpi slt, %0, %7 : vector<1x256xi32>
    %c240_i32 = arith.constant 240 : i32
    %9 = vector.broadcast %c240_i32 : i32 to vector<1x256xi32>
    %10 = arith.cmpi sge, %0, %9 : vector<1x256xi32>
    %c0 = arith.constant 0 : index
    %11 = memref.load %arg1[%c0] : memref<1xf32, #tpu.memory_space<smem>>
    %c0_1 = arith.constant 0 : index
    %c0_2 = arith.constant 0 : index
    %c0_3 = arith.constant 0 : index
    %12 = vector.load %arg2[%c0_1, %c0_2, %c0_3] : memref<1x4x256xf32, #tpu.memory_space<vmem>>, vector<1x4x256xf32>
    %13 = vector.shape_cast %12 : vector<1x4x256xf32> to vector<4x256xf32>
    %c255_i32 = arith.constant 255 : i32
    %14 = tpu.dynamic_rotate %13 by %c255_i32 dim 1 : vector<4x256xf32>, i32 -> vector<4x256xf32>
    %c1_i32 = arith.constant 1 : i32
    %15 = tpu.dynamic_rotate %13 by %c1_i32 dim 1 : vector<4x256xf32>, i32 -> vector<4x256xf32>
    %16 = vector.shape_cast %4 : vector<1x256xi1> to vector<1x256xi1>
    %17 = vector.broadcast %16 : vector<1x256xi1> to vector<4x256xi1>
    %18 = arith.select %17, %14, %15 : vector<4x256xi1>, vector<4x256xf32>
    %19 = vector.shape_cast %6 : vector<1x256xi1> to vector<1x256xi1>
    %20 = vector.broadcast %19 : vector<1x256xi1> to vector<4x256xi1>
    %21 = arith.select %20, %15, %14 : vector<4x256xi1>, vector<4x256xf32>
    %c240_i32_4 = arith.constant 240 : i32
    %22 = tpu.dynamic_rotate %18 by %c240_i32_4 dim 1 : vector<4x256xf32>, i32 -> vector<4x256xf32>
    %c16_i32_5 = arith.constant 16 : i32
    %23 = tpu.dynamic_rotate %18 by %c16_i32_5 dim 1 : vector<4x256xf32>, i32 -> vector<4x256xf32>
    %24 = vector.shape_cast %8 : vector<1x256xi1> to vector<1x256xi1>
    %25 = vector.broadcast %24 : vector<1x256xi1> to vector<4x256xi1>
    %26 = arith.select %25, %22, %23 : vector<4x256xi1>, vector<4x256xf32>
    %27 = vector.shape_cast %10 : vector<1x256xi1> to vector<1x256xi1>
    %28 = vector.broadcast %27 : vector<1x256xi1> to vector<4x256xi1>
    %29 = arith.select %28, %23, %22 : vector<4x256xi1>, vector<4x256xf32>
    %c240_i32_6 = arith.constant 240 : i32
    %30 = tpu.dynamic_rotate %13 by %c240_i32_6 dim 1 : vector<4x256xf32>, i32 -> vector<4x256xf32>
    %c16_i32_7 = arith.constant 16 : i32
    %31 = tpu.dynamic_rotate %13 by %c16_i32_7 dim 1 : vector<4x256xf32>, i32 -> vector<4x256xf32>
    %32 = vector.shape_cast %8 : vector<1x256xi1> to vector<1x256xi1>
    %33 = vector.broadcast %32 : vector<1x256xi1> to vector<4x256xi1>
    %34 = arith.select %33, %30, %31 : vector<4x256xi1>, vector<4x256xf32>
    %35 = vector.shape_cast %10 : vector<1x256xi1> to vector<1x256xi1>
    %36 = vector.broadcast %35 : vector<1x256xi1> to vector<4x256xi1>
    %37 = arith.select %36, %31, %30 : vector<4x256xi1>, vector<4x256xf32>
    %c240_i32_8 = arith.constant 240 : i32
    %38 = tpu.dynamic_rotate %21 by %c240_i32_8 dim 1 : vector<4x256xf32>, i32 -> vector<4x256xf32>
    %c16_i32_9 = arith.constant 16 : i32
    %39 = tpu.dynamic_rotate %21 by %c16_i32_9 dim 1 : vector<4x256xf32>, i32 -> vector<4x256xf32>
    %40 = vector.shape_cast %8 : vector<1x256xi1> to vector<1x256xi1>
    %41 = vector.broadcast %40 : vector<1x256xi1> to vector<4x256xi1>
    %42 = arith.select %41, %38, %39 : vector<4x256xi1>, vector<4x256xf32>
    %43 = vector.shape_cast %10 : vector<1x256xi1> to vector<1x256xi1>
    %44 = vector.broadcast %43 : vector<1x256xi1> to vector<4x256xi1>
    %45 = arith.select %44, %39, %38 : vector<4x256xi1>, vector<4x256xf32>
    %46 = tpu.concatenate %26, %34, %42, %18, %13, %21, %29, %37, %45 in 0 : vector<4x256xf32>, vector<4x256xf32>, vector<4x256xf32>, vector<4x256xf32>, vector<4x256xf32>, vector<4x256xf32>, vector<4x256xf32>, vector<4x256xf32>, vector<4x256xf32> -> vector<36x256xf32>
    %47 = arith.truncf %46 : vector<36x256xf32> to vector<36x256xbf16>
    %c0_10 = arith.constant 0 : index
    %c0_11 = arith.constant 0 : index
    %48 = vector.load %arg3[%c0_10, %c0_11] : memref<4x36xbf16, #tpu.memory_space<vmem>>, vector<4x36xbf16>
    %cst = arith.constant dense<0.000000e+00> : vector<4x256xf32>
    %49 = tpu.matmul %48, %47, %cst {dimension_numbers = #tpu.dot_dimension_numbers<[1], [0], [0], [1], [0, 0, 1, 1], [], []>} : vector<4x36xbf16>, vector<36x256xbf16>, vector<4x256xf32> -> vector<4x256xf32>
    %cst_12 = arith.constant dense<0.000000e+00> : vector<4xf32>
    %50 = vector.multi_reduction <add>, %49, %cst_12 [1] : vector<4x256xf32> to vector<4xf32>
    %51 = vector.shape_cast %50 : vector<4xf32> to vector<4x1xf32>
    %cst_13 = arith.constant 3.906250e-03 : f32
    %52 = vector.broadcast %cst_13 : f32 to vector<4x1xf32>
    %53 = arith.mulf %51, %52 : vector<4x1xf32>
    %54 = vector.broadcast %53 : vector<4x1xf32> to vector<4x256xf32>
    %55 = arith.subf %49, %54 : vector<4x256xf32>
    %56 = arith.mulf %55, %55 : vector<4x256xf32>
    %cst_14 = arith.constant dense<0.000000e+00> : vector<4xf32>
    %57 = vector.multi_reduction <add>, %56, %cst_14 [1] : vector<4x256xf32> to vector<4xf32>
    %58 = vector.shape_cast %57 : vector<4xf32> to vector<4x1xf32>
    %cst_15 = arith.constant 3.906250e-03 : f32
    %59 = vector.broadcast %cst_15 : f32 to vector<4x1xf32>
    %60 = arith.mulf %58, %59 : vector<4x1xf32>
    %cst_16 = arith.constant 9.99999974E-6 : f32
    %61 = vector.broadcast %cst_16 : f32 to vector<4x1xf32>
    %62 = arith.addf %60, %61 : vector<4x1xf32>
    %63 = math.rsqrt %62 : vector<4x1xf32>
    %64 = vector.broadcast %63 : vector<4x1xf32> to vector<4x256xf32>
    %65 = arith.mulf %55, %64 : vector<4x256xf32>
    %c0_17 = arith.constant 0 : index
    %c0_18 = arith.constant 0 : index
    %66 = vector.load %arg4[%c0_17, %c0_18] : memref<4x1xf32, #tpu.memory_space<vmem>>, vector<4x1xf32>
    %67 = vector.broadcast %66 : vector<4x1xf32> to vector<4x256xf32>
    %68 = arith.mulf %65, %67 : vector<4x256xf32>
    %c0_19 = arith.constant 0 : index
    %c0_20 = arith.constant 0 : index
    %69 = vector.load %arg5[%c0_19, %c0_20] : memref<4x1xf32, #tpu.memory_space<vmem>>, vector<4x1xf32>
    %70 = vector.broadcast %69 : vector<4x1xf32> to vector<4x256xf32>
    %71 = arith.addf %68, %70 : vector<4x256xf32>
    %cst_21 = arith.constant 0.000000e+00 : f32
    %72 = vector.broadcast %cst_21 : f32 to vector<4x256xf32>
    %73 = arith.maximumf %71, %72 : vector<4x256xf32>
    %c255_i32_22 = arith.constant 255 : i32
    %74 = tpu.dynamic_rotate %73 by %c255_i32_22 dim 1 : vector<4x256xf32>, i32 -> vector<4x256xf32>
    %c1_i32_23 = arith.constant 1 : i32
    %75 = tpu.dynamic_rotate %73 by %c1_i32_23 dim 1 : vector<4x256xf32>, i32 -> vector<4x256xf32>
    %76 = vector.shape_cast %4 : vector<1x256xi1> to vector<1x256xi1>
    %77 = vector.broadcast %76 : vector<1x256xi1> to vector<4x256xi1>
    %78 = arith.select %77, %74, %75 : vector<4x256xi1>, vector<4x256xf32>
    %79 = vector.shape_cast %6 : vector<1x256xi1> to vector<1x256xi1>
    %80 = vector.broadcast %79 : vector<1x256xi1> to vector<4x256xi1>
    %81 = arith.select %80, %75, %74 : vector<4x256xi1>, vector<4x256xf32>
    %c240_i32_24 = arith.constant 240 : i32
    %82 = tpu.dynamic_rotate %78 by %c240_i32_24 dim 1 : vector<4x256xf32>, i32 -> vector<4x256xf32>
    %c16_i32_25 = arith.constant 16 : i32
    %83 = tpu.dynamic_rotate %78 by %c16_i32_25 dim 1 : vector<4x256xf32>, i32 -> vector<4x256xf32>
    %84 = vector.shape_cast %8 : vector<1x256xi1> to vector<1x256xi1>
    %85 = vector.broadcast %84 : vector<1x256xi1> to vector<4x256xi1>
    %86 = arith.select %85, %82, %83 : vector<4x256xi1>, vector<4x256xf32>
    %87 = vector.shape_cast %10 : vector<1x256xi1> to vector<1x256xi1>
    %88 = vector.broadcast %87 : vector<1x256xi1> to vector<4x256xi1>
    %89 = arith.select %88, %83, %82 : vector<4x256xi1>, vector<4x256xf32>
    %c240_i32_26 = arith.constant 240 : i32
    %90 = tpu.dynamic_rotate %73 by %c240_i32_26 dim 1 : vector<4x256xf32>, i32 -> vector<4x256xf32>
    %c16_i32_27 = arith.constant 16 : i32
    %91 = tpu.dynamic_rotate %73 by %c16_i32_27 dim 1 : vector<4x256xf32>, i32 -> vector<4x256xf32>
    %92 = vector.shape_cast %8 : vector<1x256xi1> to vector<1x256xi1>
    %93 = vector.broadcast %92 : vector<1x256xi1> to vector<4x256xi1>
    %94 = arith.select %93, %90, %91 : vector<4x256xi1>, vector<4x256xf32>
    %95 = vector.shape_cast %10 : vector<1x256xi1> to vector<1x256xi1>
    %96 = vector.broadcast %95 : vector<1x256xi1> to vector<4x256xi1>
    %97 = arith.select %96, %91, %90 : vector<4x256xi1>, vector<4x256xf32>
    %c240_i32_28 = arith.constant 240 : i32
    %98 = tpu.dynamic_rotate %81 by %c240_i32_28 dim 1 : vector<4x256xf32>, i32 -> vector<4x256xf32>
    %c16_i32_29 = arith.constant 16 : i32
    %99 = tpu.dynamic_rotate %81 by %c16_i32_29 dim 1 : vector<4x256xf32>, i32 -> vector<4x256xf32>
    %100 = vector.shape_cast %8 : vector<1x256xi1> to vector<1x256xi1>
    %101 = vector.broadcast %100 : vector<1x256xi1> to vector<4x256xi1>
    %102 = arith.select %101, %98, %99 : vector<4x256xi1>, vector<4x256xf32>
    %103 = vector.shape_cast %10 : vector<1x256xi1> to vector<1x256xi1>
    %104 = vector.broadcast %103 : vector<1x256xi1> to vector<4x256xi1>
    %105 = arith.select %104, %99, %98 : vector<4x256xi1>, vector<4x256xf32>
    %106 = tpu.concatenate %86, %94, %102, %78, %73, %81, %89, %97, %105 in 0 : vector<4x256xf32>, vector<4x256xf32>, vector<4x256xf32>, vector<4x256xf32>, vector<4x256xf32>, vector<4x256xf32>, vector<4x256xf32>, vector<4x256xf32>, vector<4x256xf32> -> vector<36x256xf32>
    %107 = arith.truncf %106 : vector<36x256xf32> to vector<36x256xbf16>
    %c0_30 = arith.constant 0 : index
    %c0_31 = arith.constant 0 : index
    %108 = vector.load %arg6[%c0_30, %c0_31] : memref<4x36xbf16, #tpu.memory_space<vmem>>, vector<4x36xbf16>
    %cst_32 = arith.constant dense<0.000000e+00> : vector<4x256xf32>
    %109 = tpu.matmul %108, %107, %cst_32 {dimension_numbers = #tpu.dot_dimension_numbers<[1], [0], [0], [1], [0, 0, 1, 1], [], []>} : vector<4x36xbf16>, vector<36x256xbf16>, vector<4x256xf32> -> vector<4x256xf32>
    %cst_33 = arith.constant dense<0.000000e+00> : vector<4xf32>
    %110 = vector.multi_reduction <add>, %109, %cst_33 [1] : vector<4x256xf32> to vector<4xf32>
    %111 = vector.shape_cast %110 : vector<4xf32> to vector<4x1xf32>
    %cst_34 = arith.constant 3.906250e-03 : f32
    %112 = vector.broadcast %cst_34 : f32 to vector<4x1xf32>
    %113 = arith.mulf %111, %112 : vector<4x1xf32>
    %114 = vector.broadcast %113 : vector<4x1xf32> to vector<4x256xf32>
    %115 = arith.subf %109, %114 : vector<4x256xf32>
    %116 = arith.mulf %115, %115 : vector<4x256xf32>
    %cst_35 = arith.constant dense<0.000000e+00> : vector<4xf32>
    %117 = vector.multi_reduction <add>, %116, %cst_35 [1] : vector<4x256xf32> to vector<4xf32>
    %118 = vector.shape_cast %117 : vector<4xf32> to vector<4x1xf32>
    %cst_36 = arith.constant 3.906250e-03 : f32
    %119 = vector.broadcast %cst_36 : f32 to vector<4x1xf32>
    %120 = arith.mulf %118, %119 : vector<4x1xf32>
    %cst_37 = arith.constant 9.99999974E-6 : f32
    %121 = vector.broadcast %cst_37 : f32 to vector<4x1xf32>
    %122 = arith.addf %120, %121 : vector<4x1xf32>
    %123 = math.rsqrt %122 : vector<4x1xf32>
    %124 = vector.broadcast %123 : vector<4x1xf32> to vector<4x256xf32>
    %125 = arith.mulf %115, %124 : vector<4x256xf32>
    %c0_38 = arith.constant 0 : index
    %c0_39 = arith.constant 0 : index
    %126 = vector.load %arg7[%c0_38, %c0_39] : memref<4x1xf32, #tpu.memory_space<vmem>>, vector<4x1xf32>
    %127 = vector.broadcast %126 : vector<4x1xf32> to vector<4x256xf32>
    %128 = arith.mulf %125, %127 : vector<4x256xf32>
    %c0_40 = arith.constant 0 : index
    %c0_41 = arith.constant 0 : index
    %129 = vector.load %arg8[%c0_40, %c0_41] : memref<4x1xf32, #tpu.memory_space<vmem>>, vector<4x1xf32>
    %130 = vector.broadcast %129 : vector<4x1xf32> to vector<4x256xf32>
    %131 = arith.addf %128, %130 : vector<4x256xf32>
    %132 = vector.broadcast %11 : f32 to vector<4x256xf32>
    %133 = arith.mulf %132, %131 : vector<4x256xf32>
    %134 = arith.addf %133, %13 : vector<4x256xf32>
    %c0_42 = arith.constant 0 : index
    %c0_43 = arith.constant 0 : index
    %c0_44 = arith.constant 0 : index
    %135 = vector.load %arg9[%c0_42, %c0_43, %c0_44] : memref<1x4x256xf32, #tpu.memory_space<vmem>>, vector<1x4x256xf32>
    %136 = vector.shape_cast %135 : vector<1x4x256xf32> to vector<4x256xf32>
    %137 = vector.shape_cast %134 : vector<4x256xf32> to vector<1x4x256xf32>
    tpu.vector_store %arg9[%c0_42, %c0_43, %c0_44], %137 {strides = array<i32>} : memref<1x4x256xf32, #tpu.memory_space<vmem>>, vector<1x4x256xf32>,
    return
  }
  func.func @transform_0(%arg0: i32) -> i32 {
    %c0_i32 = arith.constant 0 : i32
    %c0_i32_0 = arith.constant 0 : i32
    return %c0_i32 : i32
  }
  func.func @transform_1(%arg0: i32) -> (i32, i32, i32) {
    %c0_i32 = arith.constant 0 : i32
    %c0_i32_0 = arith.constant 0 : i32
    %c0_i32_1 = arith.constant 0 : i32
    return %arg0, %c0_i32, %c0_i32_0 : i32, i32, i32
  }
  func.func @transform_2(%arg0: i32) -> (i32, i32) {
    %c0_i32 = arith.constant 0 : i32
    %c0_i32_0 = arith.constant 0 : i32
    %c0_i32_1 = arith.constant 0 : i32
    return %c0_i32, %c0_i32_0 : i32, i32
  }
  func.func @transform_3(%arg0: i32) -> (i32, i32) {
    %c0_i32 = arith.constant 0 : i32
    %c0_i32_0 = arith.constant 0 : i32
    %c0_i32_1 = arith.constant 0 : i32
    return %c0_i32, %c0_i32_0 : i32, i32
  }
  func.func @transform_4(%arg0: i32) -> (i32, i32) {
    %c0_i32 = arith.constant 0 : i32
    %c0_i32_0 = arith.constant 0 : i32
    %c0_i32_1 = arith.constant 0 : i32
    return %c0_i32, %c0_i32_0 : i32, i32
  }
  func.func @transform_5(%arg0: i32) -> (i32, i32) {
    %c0_i32 = arith.constant 0 : i32
    %c0_i32_0 = arith.constant 0 : i32
    %c0_i32_1 = arith.constant 0 : i32
    return %c0_i32, %c0_i32_0 : i32, i32
  }
  func.func @transform_6(%arg0: i32) -> (i32, i32) {
    %c0_i32 = arith.constant 0 : i32
    %c0_i32_0 = arith.constant 0 : i32
    %c0_i32_1 = arith.constant 0 : i32
    return %c0_i32, %c0_i32_0 : i32, i32
  }
  func.func @transform_7(%arg0: i32) -> (i32, i32) {
    %c0_i32 = arith.constant 0 : i32
    %c0_i32_0 = arith.constant 0 : i32
    %c0_i32_1 = arith.constant 0 : i32
    return %c0_i32, %c0_i32_0 : i32, i32
  }
  func.func @transform_8(%arg0: i32) -> (i32, i32, i32) {
    %c0_i32 = arith.constant 0 : i32
    %c0_i32_0 = arith.constant 0 : i32
    %c0_i32_1 = arith.constant 0 : i32
    return %arg0, %c0_i32, %c0_i32_0 : i32, i32, i32
  }
}

</mosaic_0001>

<llo_original>
// kernel: tpu_custom_call.1
$region0: #{tpu_custom_call.1}
  #allocation0 [shape = 'u32[]', space=smem, size = 0x4, offset = 0x4, fixed_abs, tag = 'smem constant byte address 0x4 - core index']
  #allocation1 [shape = 'u32[144,128]{1,0:T(1,128)}', space=vmem, size = 0x12000, scoped, tag = 'internal scratch']
  #allocation2 [shape = 'f32[1]{0:T(128)S(6)}', space=smem, size = 0x200, scoped, tag = 'scoped memory for tpu_custom_call.1']
  %s0 = inlined_call_operand.<no memory space> [shape: f32[1], index: 0, kind: input, shape index: {}]
  %s1 = inlined_call_operand.vmem [shape: f32[2,4,256], index: 1, kind: input, shape index: {}]
  %s2 = inlined_call_operand.vmem [shape: bf16[4,36], index: 2, kind: input, shape index: {}]
  %s3 = inlined_call_operand.vmem [shape: f32[4,1], index: 3, kind: input, shape index: {}]
  %s4 = inlined_call_operand.vmem [shape: f32[4,1], index: 4, kind: input, shape index: {}]
  %s5 = inlined_call_operand.vmem [shape: bf16[4,36], index: 5, kind: input, shape index: {}]
  %s6 = inlined_call_operand.vmem [shape: f32[4,1], index: 6, kind: input, shape index: {}]
  %s7 = inlined_call_operand.vmem [shape: f32[4,1], index: 7, kind: input, shape index: {}]
  %s8 = inlined_call_operand.hbm [shape: f32[2,4,256], index: 8, kind: output, shape index: {}]
  %s9 = sld [smem:[#allocation0]]
  $region65: #{tpu_custom_call.1} parent=0
    _
  %s11 = ssub.s32 1, %s9
  %s12 = scalar_select 0, %s11, %s9
  %13 = sst [smem:[#allocation2]] %s0
  $region1: #{tpu_custom_call.1} parent=0
    #allocation3 [shape = 'u8[8192]{0}', space=vmem, size = 0x2000, scoped, tag = 'output window, operand 0']
    #allocation4 [shape = 's32[2]{0}', space=sflag, size = 0x8, scoped, tag = 'scoped memory for tpu_custom_call.1']
    %14 = vsyncpa [#allocation4], 0
    %s15 = scalar_lea.sflag [#allocation4], 1
    %16 = vsyncpa %s15, 0
    loop: start=0, step=1, limit=4
    $region2: #{tpu_custom_call.1} parent=1 // loop_pre_header
      _
    $region3: #{tpu_custom_call.1} parent=1 // loop_header
      %s18 = sphi 0, %s22
      %p19 = scmp.ge.s32.totalorder %s18, 4
      %s26 = sphi 0, %s26
      %s28 = sphi 0, %s26
      %s29 = sphi 0, %s28
      %s43 = sphi 0, %s29
      %s49 = sphi 0, %s51
      %s52 = sphi 0, %s49
      %s53 = sphi 0, %s52
      %s69 = sphi 0, %s53
      %s73 = sphi 0, %s73
      %s75 = sphi 0, %s73
      %s76 = sphi 0, %s75
      %s90 = sphi 0, %s76
      %s94 = sphi 0, %s94
      %s96 = sphi 0, %s94
      %s97 = sphi 0, %s96
      %s111 = sphi 0, %s97
      %s115 = sphi 0, %s115
      %s117 = sphi 0, %s115
      %s118 = sphi 0, %s117
      %s132 = sphi 0, %s118
      %s136 = sphi 0, %s136
      %s138 = sphi 0, %s136
      %s139 = sphi 0, %s138
      %s153 = sphi 0, %s139
      %s157 = sphi 0, %s157
      %s159 = sphi 0, %s157
      %s160 = sphi 0, %s159
      %s174 = sphi 0, %s160
      %s178 = sphi 0, %s178
      %s180 = sphi 0, %s178
      %s181 = sphi 0, %s180
      %s195 = sphi 0, %s181
      %s201 = sphi 0, %s203
      %s204 = sphi 0, %s201
      %s205 = sphi 0, %s204
      %s221 = sphi 0, %s205
    $region4: #{tpu_custom_call.1} parent=1 // loop_header_branch
      %21 = sbr.rel (%p19) target = $region8
    $region5: #{tpu_custom_call.1} parent=1 // loop_body
      %s23 = ssub.s32 %s18, 1
      %s24 = ssub.s32 %s18, 2
      %s25 = sadd.s32 %s18, 1
      %s27 = sadd.s32 %s26, 1
      %p30 = scmp.eq.s32.totalorder %s18, 1
      %p31 = scmp.ne.s32.totalorder %s26, %s28
      %p32 = scmp.eq.s32.totalorder %s18, 0
      %p33 = por %p31, %p32
      %p34 = scmp.ne.s32.totalorder %s26, %s28
      %p35 = scmp.eq.s32.totalorder %s23, 1
      %p36 = por %p34, %p35
      %p37 = scmp.ne.s32.totalorder %s28, %s29
      %p38 = scmp.eq.s32.totalorder %s23, 0
      %p39 = por %p37, %p38
      %p40 = scmp.ne.s32.totalorder %s28, %s29
      %p41 = scmp.eq.s32.totalorder %s24, 1
      %p42 = por %p40, %p41
      %p44 = scmp.ne.s32.totalorder %s29, %s43
      %p45 = scmp.eq.s32.totalorder %s24, 0
      %p46 = por %p44, %p45
      %s47 = ssub.s32 %s18, %s25
      %p48 = scmp.eq.s32.totalorder %s47, 0
      %s50 = sadd.s32 %s49, 1
      %s51 = scalar_select %p48, %s49, %s50
      %p54 = pneg %p48
      %p55 = scmp.eq.s32.totalorder %s18, 1
      %p56 = por %p54, %p55
      %p57 = scmp.ne.s32.totalorder %s49, %s52
      %p58 = scmp.eq.s32.totalorder %s18, 0
      %p59 = por %p57, %p58
      %p60 = scmp.ne.s32.totalorder %s49, %s52
      %p61 = scmp.eq.s32.totalorder %s23, 1
      %p62 = por %p60, %p61
      %p63 = scmp.ne.s32.totalorder %s52, %s53
      %p64 = scmp.eq.s32.totalorder %s23, 0
      %p65 = por %p63, %p64
      %p66 = scmp.ne.s32.totalorder %s52, %s53
      %p67 = scmp.eq.s32.totalorder %s24, 1
      %p68 = por %p66, %p67
      %p70 = scmp.ne.s32.totalorder %s53, %s69
      %p71 = scmp.eq.s32.totalorder %s24, 0
      %p72 = por %p70, %p71
      %s74 = sadd.s32 %s73, 1
      %p77 = scmp.eq.s32.totalorder %s18, 1
      %p78 = scmp.ne.s32.totalorder %s73, %s75
      %p79 = scmp.eq.s32.totalorder %s18, 0
      %p80 = por %p78, %p79
      %p81 = scmp.ne.s32.totalorder %s73, %s75
      %p82 = scmp.eq.s32.totalorder %s23, 1
      %p83 = por %p81, %p82
      %p84 = scmp.ne.s32.totalorder %s75, %s76
      %p85 = scmp.eq.s32.totalorder %s23, 0
      %p86 = por %p84, %p85
      %p87 = scmp.ne.s32.totalorder %s75, %s76
      %p88 = scmp.eq.s32.totalorder %s24, 1
      %p89 = por %p87, %p88
      %p91 = scmp.ne.s32.totalorder %s76, %s90
      %p92 = scmp.eq.s32.totalorder %s24, 0
      %p93 = por %p91, %p92
      %s95 = sadd.s32 %s94, 1
      %p98 = scmp.eq.s32.totalorder %s18, 1
      %p99 = scmp.ne.s32.totalorder %s94, %s96
      %p100 = scmp.eq.s32.totalorder %s18, 0
      %p101 = por %p99, %p100
      %p102 = scmp.ne.s32.totalorder %s94, %s96
      %p103 = scmp.eq.s32.totalorder %s23, 1
      %p104 = por %p102, %p103
      %p105 = scmp.ne.s32.totalorder %s96, %s97
      %p106 = scmp.eq.s32.totalorder %s23, 0
      %p107 = por %p105, %p106
      %p108 = scmp.ne.s32.totalorder %s96, %s97
      %p109 = scmp.eq.s32.totalorder %s24, 1
      %p110 = por %p108, %p109
      %p112 = scmp.ne.s32.totalorder %s97, %s111
      %p113 = scmp.eq.s32.totalorder %s24, 0
      %p114 = por %p112, %p113
      %s116 = sadd.s32 %s115, 1
      %p119 = scmp.eq.s32.totalorder %s18, 1
      %p120 = scmp.ne.s32.totalorder %s115, %s117
      %p121 = scmp.eq.s32.totalorder %s18, 0
      %p122 = por %p120, %p121
      %p123 = scmp.ne.s32.totalorder %s115, %s117
      %p124 = scmp.eq.s32.totalorder %s23, 1
      %p125 = por %p123, %p124
      %p126 = scmp.ne.s32.totalorder %s117, %s118
      %p127 = scmp.eq.s32.totalorder %s23, 0
      %p128 = por %p126, %p127
      %p129 = scmp.ne.s32.totalorder %s117, %s118
      %p130 = scmp.eq.s32.totalorder %s24, 1
      %p131 = por %p129, %p130
      %p133 = scmp.ne.s32.totalorder %s118, %s132
      %p134 = scmp.eq.s32.totalorder %s24, 0
      %p135 = por %p133, %p134
      %s137 = sadd.s32 %s136, 1
      %p140 = scmp.eq.s32.totalorder %s18, 1
      %p141 = scmp.ne.s32.totalorder %s136, %s138
      %p142 = scmp.eq.s32.totalorder %s18, 0
      %p143 = por %p141, %p142
      %p144 = scmp.ne.s32.totalorder %s136, %s138
      %p145 = scmp.eq.s32.totalorder %s23, 1
      %p146 = por %p144, %p145
      %p147 = scmp.ne.s32.totalorder %s138, %s139
      %p148 = scmp.eq.s32.totalorder %s23, 0
      %p149 = por %p147, %p148
      %p150 = scmp.ne.s32.totalorder %s138, %s139
      %p151 = scmp.eq.s32.totalorder %s24, 1
      %p152 = por %p150, %p151
      %p154 = scmp.ne.s32.totalorder %s139, %s153
      %p155 = scmp.eq.s32.totalorder %s24, 0
      %p156 = por %p154, %p155
      %s158 = sadd.s32 %s157, 1
      %p161 = scmp.eq.s32.totalorder %s18, 1
      %p162 = scmp.ne.s32.totalorder %s157, %s159
      %p163 = scmp.eq.s32.totalorder %s18, 0
      %p164 = por %p162, %p163
      %p165 = scmp.ne.s32.totalorder %s157, %s159
      %p166 = scmp.eq.s32.totalorder %s23, 1
      %p167 = por %p165, %p166
      %p168 = scmp.ne.s32.totalorder %s159, %s160
      %p169 = scmp.eq.s32.totalorder %s23, 0
      %p170 = por %p168, %p169
      %p171 = scmp.ne.s32.totalorder %s159, %s160
      %p172 = scmp.eq.s32.totalorder %s24, 1
      %p173 = por %p171, %p172
      %p175 = scmp.ne.s32.totalorder %s160, %s174
      %p176 = scmp.eq.s32.totalorder %s24, 0
      %p177 = por %p175, %p176
      %s179 = sadd.s32 %s178, 1
      %p182 = scmp.eq.s32.totalorder %s18, 1
      %p183 = scmp.ne.s32.totalorder %s178, %s180
      %p184 = scmp.eq.s32.totalorder %s18, 0
      %p185 = por %p183, %p184
      %p186 = scmp.ne.s32.totalorder %s178, %s180
      %p187 = scmp.eq.s32.totalorder %s23, 1
      %p188 = por %p186, %p187
      %p189 = scmp.ne.s32.totalorder %s180, %s181
      %p190 = scmp.eq.s32.totalorder %s23, 0
      %p191 = por %p189, %p190
      %p192 = scmp.ne.s32.totalorder %s180, %s181
      %p193 = scmp.eq.s32.totalorder %s24, 1
      %p194 = por %p192, %p193
      %p196 = scmp.ne.s32.totalorder %s181, %s195
      %p197 = scmp.eq.s32.totalorder %s24, 0
      %p198 = por %p196, %p197
      %s199 = ssub.s32 %s18, %s25
      %p200 = scmp.eq.s32.totalorder %s199, 0
      %s202 = sadd.s32 %s201, 1
      %s203 = scalar_select %p200, %s201, %s202
      %p206 = pneg %p200
      %p207 = scmp.eq.s32.totalorder %s18, 1
      %p208 = por %p206, %p207
      %p209 = scmp.ne.s32.totalorder %s201, %s204
      %p210 = scmp.eq.s32.totalorder %s18, 0
      %p211 = por %p209, %p210
      %p212 = scmp.ne.s32.totalorder %s201, %s204
      %p213 = scmp.eq.s32.totalorder %s23, 1
      %p214 = por %p212, %p213
      %p215 = scmp.ne.s32.totalorder %s204, %s205
      %p216 = scmp.eq.s32.totalorder %s23, 0
      %p217 = por %p215, %p216
      %p218 = scmp.ne.s32.totalorder %s204, %s205
      %p219 = scmp.eq.s32.totalorder %s24, 1
      %p220 = por %p218, %p219
      %p222 = scmp.ne.s32.totalorder %s205, %s221
      %p223 = scmp.eq.s32.totalorder %s24, 0
      %p224 = por %p222, %p223
      %p225 = scmp.le.s32.totalorder 1, %s18
      %p226 = scmp.lt.s32.totalorder %s18, 3
      %p227 = pnand %p225, %p226
      %p228 = pneg %p227
      // Predicated region
      $region9: #{tpu_custom_call.1} parent=5 // pred_check
        _
      $region10: #{tpu_custom_call.1} parent=5 // pred_check_branch
        %230 = sbr.rel (%p227) target = $region12
      $region11: #{tpu_custom_call.1} parent=5 // pred_region
        %s231 = ssub.s32 %s18, 1
        // Predicated region
        $region13: #{tpu_custom_call.1} parent=11 // pred_check
          %p232 = pneg %p39
        $region14: #{tpu_custom_call.1} parent=11 // pred_check_branch
          %234 = sbr.rel (%p232) target = $region16
        $region15: #{tpu_custom_call.1} parent=11 // pred_region
          _
        $region16: #{tpu_custom_call.1} parent=11 // pred_fallthru
          _
        // Predicated region
        $region17: #{tpu_custom_call.1} parent=11 // pred_check
          %p235 = pneg %p86
        $region18: #{tpu_custom_call.1} parent=11 // pred_check_branch
          %237 = sbr.rel (%p235) target = $region20
        $region19: #{tpu_custom_call.1} parent=11 // pred_region
          _
        $region20: #{tpu_custom_call.1} parent=11 // pred_fallthru
          _
        // Predicated region
        $region21: #{tpu_custom_call.1} parent=11 // pred_check
          %p238 = pneg %p107
        $region22: #{tpu_custom_call.1} parent=11 // pred_check_branch
          %240 = sbr.rel (%p238) target = $region24
        $region23: #{tpu_custom_call.1} parent=11 // pred_region
          _
        $region24: #{tpu_custom_call.1} parent=11 // pred_fallthru
          _
        // Predicated region
        $region25: #{tpu_custom_call.1} parent=11 // pred_check
          %p241 = pneg %p128
        $region26: #{tpu_custom_call.1} parent=11 // pred_check_branch
          %243 = sbr.rel (%p241) target = $region28
        $region27: #{tpu_custom_call.1} parent=11 // pred_region
          _
        $region28: #{tpu_custom_call.1} parent=11 // pred_fallthru
          _
        // Predicated region
        $region29: #{tpu_custom_call.1} parent=11 // pred_check
          %p244 = pneg %p149
        $region30: #{tpu_custom_call.1} parent=11 // pred_check_branch
          %246 = sbr.rel (%p244) target = $region32
        $region31: #{tpu_custom_call.1} parent=11 // pred_region
          _
        $region32: #{tpu_custom_call.1} parent=11 // pred_fallthru
          _
        // Predicated region
        $region33: #{tpu_custom_call.1} parent=11 // pred_check
          %p247 = pneg %p170
        $region34: #{tpu_custom_call.1} parent=11 // pred_check_branch
          %249 = sbr.rel (%p247) target = $region36
        $region35: #{tpu_custom_call.1} parent=11 // pred_region
          _
        $region36: #{tpu_custom_call.1} parent=11 // pred_fallthru
          _
        // Predicated region
        $region37: #{tpu_custom_call.1} parent=11 // pred_check
          %p250 = pneg %p191
        $region38: #{tpu_custom_call.1} parent=11 // pred_check_branch
          %252 = sbr.rel (%p250) target = $region40
        $region39: #{tpu_custom_call.1} parent=11 // pred_region
          _
        $region40: #{tpu_custom_call.1} parent=11 // pred_fallthru
          _
      $region12: #{tpu_custom_call.1} parent=5 // pred_fallthru
        _
      %p253 = scmp.lt.s32.totalorder %s18, 2
      // Predicated region
      $region41: #{tpu_custom_call.1} parent=5 // pred_check
        %p254 = pneg %p253
      $region42: #{tpu_custom_call.1} parent=5 // pred_check_branch
        %256 = sbr.rel (%p254) target = $region44
      $region43: #{tpu_custom_call.1} parent=5 // pred_region
        // Predicated region
        $region45: #{tpu_custom_call.1} parent=43 // pred_check
          %p257 = pneg %p59
        $region46: #{tpu_custom_call.1} parent=43 // pred_check_branch
          %259 = sbr.rel (%p257) target = $region48
        $region47: #{tpu_custom_call.1} parent=43 // pred_region
          %p260 = scmp.lt.s32.totalorder %s18, 1
          %s261 = scalar_select %p260, %s18, 1
          %s262 = smul.addr %s261, 2
          %s263 = smul.addr %s262, 4
          %s264 = scalar_lea.vmem %s1, %s263
        $region48: #{tpu_custom_call.1} parent=43 // pred_fallthru
          _
      $region44: #{tpu_custom_call.1} parent=5 // pred_fallthru
        _
      %p265 = scmp.le.s32.totalorder 1, %s18
      %p266 = scmp.lt.s32.totalorder %s18, 3
      %p267 = pnand %p265, %p266
      %p268 = pneg %p267
      // Predicated region
      $region49: #{tpu_custom_call.1} parent=5 // pred_check
        _
      $region50: #{tpu_custom_call.1} parent=5 // pred_check_branch
        %270 = sbr.rel (%p267) target = $region52
      $region51: #{tpu_custom_call.1} parent=5 // pred_region
        %s271 = ssub.s32 %s18, 1
        %p272 = pneg %p39
        %p273 = pneg %p36
        %p274 = scmp.lt.s32.totalorder %s23, 1
        %s275 = scalar_select %p274, %s23, 1
        %s276 = smul.addr %s275, 2
        %s277 = smul.addr %s276, 4
        %s278 = scalar_lea.vmem %s1, %s277
        %p279 = pneg %p65
        %p280 = pneg %p62
        %p281 = pneg %p86
        %p282 = pneg %p83
        %p283 = pneg %p107
        %p284 = pneg %p104
        %p285 = pneg %p128
        %p286 = pneg %p125
        %p287 = pneg %p149
        %p288 = pneg %p146
        %p289 = pneg %p170
        %p290 = pneg %p167
        %p291 = pneg %p191
        %p292 = pneg %p188
        %p293 = pneg %p217
        %p294 = pneg %p214
        %s295 = sand.u32 %s204, 1
        %s296 = scalar_lea.sflag [#allocation4], %s295
        %s297 = sand.u32 %s204, 1
        %s298 = smul.addr %s297, 8
        %s299 = scalar_lea.vmem [#allocation3], %s298
        %p300 = scmp.lt.s32.totalorder %s23, 1
        %s301 = scalar_select %p300, %s23, 1
        %s302 = smul.addr %s301, 2
        %s303 = smul.addr %s302, 4
        %s304 = scalar_lea.vmem %s1, %s303
        %v306 = vlaneseq
        %v307 = vand.u32 %v306, 127
        %v308 = vadd.s32 %v307, 128
        %v309 = vand.u32 %v307, 15
        %v310 = vand.u32 %v308, 15
        %vm311 = vcmp.eq.s32.totalorder %v309, 0
        %vm312 = vcmp.eq.s32.totalorder %v310, 0
        %vm313 = vcmp.eq.s32.totalorder %v309, 15
        %vm314 = vcmp.eq.s32.totalorder %v310, 15
        %vm315 = vcmp.lt.s32.totalorder %v307, 16
        %vm316 = vcmp.lt.s32.totalorder %v308, 16
        %vm317 = vcmp.ge.s32.totalorder %v307, 240
        %vm318 = vcmp.ge.s32.totalorder %v308, 240
        %s319 = sld [smem:[#allocation2]]
        %v320 = vld [vmem:[%s304] sm:$0xff]
        %v322 = vcombine.high %v320, %v320
        %324 = vrot.lane.b32.xlu0 %v320, 127
        %v325 = vpop.permute.xlu0 %324
        %326 = vrot.lane.b32.xlu0 %v322, 127
        %v327 = vpop.permute.xlu0 %326
        %vm328 = vcmp.lt.s32.totalorder %v307, 127
        %v329 = vsel %vm328, %v325, %v327
        %v330 = vsel %vm328, %v327, %v325
        %331 = vrot.lane.b32.xlu0 %v320, 1
        %v332 = vpop.permute.xlu0 %331
        %333 = vrot.lane.b32.xlu0 %v322, 1
        %v334 = vpop.permute.xlu0 %333
        %vm335 = vcmp.lt.s32.totalorder %v307, 1
        %v336 = vsel %vm335, %v332, %v334
        %v337 = vsel %vm335, %v334, %v332
        %v338 = vsel %vm311, 1, 0
        %v339 = vsel %vm312, 1, 0
        %vm340 = vcmp.eq.s32.totalorder %v338, 1
        %vm341 = vcmp.eq.s32.totalorder %v339, 1
        %v342 = vsel %vm340, %v329, %v337
        %v343 = vsel %vm341, %v330, %v336
        %v344 = vsel %vm313, 1, 0
        %v345 = vsel %vm314, 1, 0
        %vm346 = vcmp.eq.s32.totalorder %v344, 1
        %vm347 = vcmp.eq.s32.totalorder %v345, 1
        %v348 = vsel %vm346, %v337, %v329
        %v349 = vsel %vm347, %v336, %v330
        %350 = vrot.lane.b32.xlu0 %v342, 112
        %v351 = vpop.permute.xlu0 %350
        %352 = vrot.lane.b32.xlu0 %v343, 112
        %v353 = vpop.permute.xlu0 %352
        %vm354 = vcmp.lt.s32.totalorder %v307, 112
        %v355 = vsel %vm354, %v351, %v353
        %v356 = vsel %vm354, %v353, %v351
        %357 = vrot.lane.b32.xlu0 %v342, 16
        %v358 = vpop.permute.xlu0 %357
        %359 = vrot.lane.b32.xlu0 %v343, 16
        %v360 = vpop.permute.xlu0 %359
        %v361 = vsel %vm315, %v358, %v360
        %v362 = vsel %vm315, %v360, %v358
        %v363 = vsel %vm315, 1, 0
        %v364 = vsel %vm316, 1, 0
        %vm365 = vcmp.eq.s32.totalorder %v363, 1
        %vm366 = vcmp.eq.s32.totalorder %v364, 1
        %v367 = vsel %vm365, %v355, %v362
        %v368 = vsel %vm366, %v356, %v361
        %v369 = vsel %vm317, 1, 0
        %v370 = vsel %vm318, 1, 0
        %vm371 = vcmp.eq.s32.totalorder %v369, 1
        %vm372 = vcmp.eq.s32.totalorder %v370, 1
        %v373 = vsel %vm371, %v362, %v355
        %v374 = vsel %vm372, %v361, %v356
        %375 = vrot.lane.b32.xlu0 %v320, 112
        %v376 = vpop.permute.xlu0 %375
        %377 = vrot.lane.b32.xlu0 %v322, 112
        %v378 = vpop.permute.xlu0 %377
        %v379 = vsel %vm354, %v376, %v378
        %v380 = vsel %vm354, %v378, %v376
        %381 = vrot.lane.b32.xlu0 %v320, 16
        %v382 = vpop.permute.xlu0 %381
        %383 = vrot.lane.b32.xlu0 %v322, 16
        %v384 = vpop.permute.xlu0 %383
        %v385 = vsel %vm315, %v382, %v384
        %v386 = vsel %vm315, %v384, %v382
        %v387 = vsel %vm365, %v379, %v386
        %v388 = vsel %vm366, %v380, %v385
        %v389 = vsel %vm371, %v386, %v379
        %v390 = vsel %vm372, %v385, %v380
        %391 = vrot.lane.b32.xlu0 %v348, 112
        %v392 = vpop.permute.xlu0 %391
        %393 = vrot.lane.b32.xlu0 %v349, 112
        %v394 = vpop.permute.xlu0 %393
        %v395 = vsel %vm354, %v392, %v394
        %v396 = vsel %vm354, %v394, %v392
        %397 = vrot.lane.b32.xlu0 %v348, 16
        %v398 = vpop.permute.xlu0 %397
        %399 = vrot.lane.b32.xlu0 %v349, 16
        %v400 = vpop.permute.xlu0 %399
        %v401 = vsel %vm315, %v398, %v400
        %v402 = vsel %vm315, %v400, %v398
        %v403 = vsel %vm365, %v395, %v402
        %v404 = vsel %vm366, %v396, %v401
        %v405 = vsel %vm371, %v402, %v395
        %v406 = vsel %vm372, %v401, %v396
        %v409 = vrot.slane %v387, 4
        %v410 = vrot.slane %v388, 4
        %v415 = vrot.slane %v342, 4
        %v416 = vrot.slane %v343, 4
        %v421 = vrot.slane %v348, 4
        %v422 = vrot.slane %v349, 4
        %v427 = vrot.slane %v389, 4
        %v428 = vrot.slane %v390, 4
        %vm431 = vcmask 1043456
        %v432 = vsel %vm431, %v367, %v409
        %v433 = vsel %vm431, %v368, %v410
        %v434 = vsel %vm431, %v403, %v415
        %v435 = vsel %vm431, %v404, %v416
        %v436 = vsel %vm431, %v320, %v421
        %v437 = vsel %vm431, %v322, %v422
        %v438 = vsel %vm431, %v373, %v427
        %v439 = vsel %vm431, %v374, %v428
        %v440 = vpack.c.bf16 %v434, %v432
        %v441 = vpack.c.bf16 %v435, %v433
        %v442 = vpack.c.bf16 %v438, %v436
        %v443 = vpack.c.bf16 %v439, %v437
        %v444 = vpack.c.bf16 %v405, %v405
        %v445 = vpack.c.bf16 %v406, %v406
        %v446 = vld [vmem:[%s2] sm:$0x3]
        %vm447 = vcmask 293888
        %v449 = vsel %vm447, %v446, 0
        %vm451 = vcmask 1041408
        %v453 = vsel %vm451, %v444, 0
        %v456 = vsel %vm451, %v445, 0
        %458 = vmatprep.subr.bf16.mxu0 %v441
        %459 = vmatpush1.bf16.msra.mxu0 %v440
        %460 = vmatprep.subr.bf16.mxu0 %v443
        %461 = vmatpush1.bf16.msra.mxu0 %v442
        %462 = vmatprep.subr.bf16.mxu0 %v456
        %463 = vmatpush1.bf16.msra.mxu0 %v453
        %464 = vmatprep.subr.bf16.mxu0 0
        %465 = vmatpush1.bf16.msra.mxu0 0
        %466 = vmatprep.subr.bf16.mxu0 0
        %467 = vmatpush1.bf16.msra.mxu0 0
        %468 = vmatprep.subr.bf16.mxu0 0
        %469 = vmatpush1.bf16.msra.mxu0 0
        %470 = vmatprep.subr.bf16.mxu0 0
        %471 = vmatpush1.bf16.msra.mxu0 0
        %472 = vmatprep.subr.bf16.mxu0 0
        %473 = vmatpush1.bf16.msra.mxu0 0
        %474 = vmatprep.subr.bf16.mxu0 0
        %475 = vmatpush1.bf16.msra.mxu0 0
        %476 = vmatprep.subr.bf16.mxu0 0
        %477 = vmatpush1.bf16.msra.mxu0 0
        %478 = vmatprep.subr.bf16.mxu0 0
        %479 = vmatpush1.bf16.msra.mxu0 0
        %480 = vmatprep.subr.bf16.mxu0 0
        %481 = vmatpush1.bf16.msra.mxu0 0
        %482 = vmatprep.subr.bf16.mxu0 0
        %483 = vmatpush1.bf16.msra.mxu0 0
        %484 = vmatprep.subr.bf16.mxu0 0
        %485 = vmatpush1.bf16.msra.mxu0 0
        %486 = vmatprep.subr.bf16.mxu0 0
        %487 = vmatpush1.bf16.msra.mxu0 0
        %488 = vmatprep.subr.bf16.mxu0 0
        %489 = vmatpush1.bf16.msra.mxu0 0
        %490 = vmatprep.mubr.bf16.mxu0 0
        %491 = vmatmul.mubr.bf16.gmra.mrb[0].mxu0 %v449
        %v492 = vpop.f32.mrb[0].mxu0
        %v493 = vadd.f32 0.0, %v492
        %v494 = vpop.f32.mrb[0].mxu0
        %v495 = vadd.f32 0.0, %v494
        %v496 = vpop.f32.mrb[0].mxu0
        %v497 = vpop.f32.mrb[0].mxu0
        %498 = vdwg.mxu0
        %v499 = vsel %vm431, %v493, 0.0
        %v500 = vsel %vm431, %v495, 0.0
        %v501 = vadd.f32 %v499, %v500
        %502 = vadd.xlane.f32.xlu0 %v501
        %v503 = vpop.xlane.xlu0 %502
        %v504 = vmul.f32 %v503, 0.00390625
        %v505 = vsub.f32 %v493, %v504
        %v506 = vsub.f32 %v495, %v504
        %v507 = vmul.f32 %v505, %v505
        %v508 = vmul.f32 %v506, %v506
        %v509 = vsel %vm431, %v507, 0.0
        %v510 = vsel %vm431, %v508, 0.0
        %v511 = vadd.f32 %v509, %v510
        %512 = vadd.xlane.f32.xlu0 %v511
        %v513 = vpop.xlane.xlu0 %512
        %v514 = vmul.f32 %v513, 0.00390625
        %v515 = vadd.f32 %v514, 1e-05
        %v516 = vrsqrt.pop %v515
        %v517 = vmul.f32 %v505, %v516
        %v518 = vmul.f32 %v506, %v516
        %v519 = vld [vmem:[%s3] sm:$0xf]
        %521 = vset.pattern.permute.xlu0 0
        %522 = vperm.xlu0 %521, %v519
        %v523 = vpop.permute.xlu0 %522
        %v525 = vmul.f32 %v517, %v523
        %v526 = vmul.f32 %v518, %v523
        %v527 = vld [vmem:[%s4] sm:$0xf]
        %529 = vset.pattern.permute.xlu0 0
        %530 = vperm.xlu0 %529, %v527
        %v531 = vpop.permute.xlu0 %530
        %v533 = vadd.f32 %v525, %v531
        %v534 = vadd.f32 %v526, %v531
        %v535 = vmax.f32 %v533, 0.0
        %v536 = vmax.f32 %v534, 0.0
        %537 = vrot.lane.b32.xlu0 %v535, 127
        %v538 = vpop.permute.xlu0 %537
        %539 = vrot.lane.b32.xlu0 %v536, 127
        %v540 = vpop.permute.xlu0 %539
        %v541 = vsel %vm328, %v538, %v540
        %v542 = vsel %vm328, %v540, %v538
        %543 = vrot.lane.b32.xlu0 %v535, 1
        %v544 = vpop.permute.xlu0 %543
        %545 = vrot.lane.b32.xlu0 %v536, 1
        %v546 = vpop.permute.xlu0 %545
        %v547 = vsel %vm335, %v544, %v546
        %v548 = vsel %vm335, %v546, %v544
        %v549 = vsel %vm340, %v541, %v548
        %v550 = vsel %vm341, %v542, %v547
        %v551 = vsel %vm346, %v548, %v541
        %v552 = vsel %vm347, %v547, %v542
        %553 = vrot.lane.b32.xlu0 %v549, 112
        %v554 = vpop.permute.xlu0 %553
        %555 = vrot.lane.b32.xlu0 %v550, 112
        %v556 = vpop.permute.xlu0 %555
        %v557 = vsel %vm354, %v554, %v556
        %v558 = vsel %vm354, %v556, %v554
        %559 = vrot.lane.b32.xlu0 %v549, 16
        %v560 = vpop.permute.xlu0 %559
        %561 = vrot.lane.b32.xlu0 %v550, 16
        %v562 = vpop.permute.xlu0 %561
        %v563 = vsel %vm315, %v560, %v562
        %v564 = vsel %vm315, %v562, %v560
        %v565 = vsel %vm365, %v557, %v564
        %v566 = vsel %vm366, %v558, %v563
        %v567 = vsel %vm371, %v564, %v557
        %v568 = vsel %vm372, %v563, %v558
        %569 = vrot.lane.b32.xlu0 %v535, 112
        %v570 = vpop.permute.xlu0 %569
        %571 = vrot.lane.b32.xlu0 %v536, 112
        %v572 = vpop.permute.xlu0 %571
        %v573 = vsel %vm354, %v570, %v572
        %v574 = vsel %vm354, %v572, %v570
        %575 = vrot.lane.b32.xlu0 %v535, 16
        %v576 = vpop.permute.xlu0 %575
        %577 = vrot.lane.b32.xlu0 %v536, 16
        %v578 = vpop.permute.xlu0 %577
        %v579 = vsel %vm315, %v576, %v578
        %v580 = vsel %vm315, %v578, %v576
        %v581 = vsel %vm365, %v573, %v580
        %v582 = vsel %vm366, %v574, %v579
        %v583 = vsel %vm371, %v580, %v573
        %v584 = vsel %vm372, %v579, %v574
        %585 = vrot.lane.b32.xlu0 %v551, 112
        %v586 = vpop.permute.xlu0 %585
        %587 = vrot.lane.b32.xlu0 %v552, 112
        %v588 = vpop.permute.xlu0 %587
        %v589 = vsel %vm354, %v586, %v588
        %v590 = vsel %vm354, %v588, %v586
        %591 = vrot.lane.b32.xlu0 %v551, 16
        %v592 = vpop.permute.xlu0 %591
        %593 = vrot.lane.b32.xlu0 %v552, 16
        %v594 = vpop.permute.xlu0 %593
        %v595 = vsel %vm315, %v592, %v594
        %v596 = vsel %vm315, %v594, %v592
        %v597 = vsel %vm365, %v589, %v596
        %v598 = vsel %vm366, %v590, %v595
        %v599 = vsel %vm371, %v596, %v589
        %v600 = vsel %vm372, %v595, %v590
        %v603 = vrot.slane %v581, 4
        %v604 = vrot.slane %v582, 4
        %v609 = vrot.slane %v549, 4
        %v610 = vrot.slane %v550, 4
        %v615 = vrot.slane %v551, 4
        %v616 = vrot.slane %v552, 4
        %v621 = vrot.slane %v583, 4
        %v622 = vrot.slane %v584, 4
        %v625 = vsel %vm431, %v565, %v603
        %v626 = vsel %vm431, %v566, %v604
        %v627 = vsel %vm431, %v597, %v609
        %v628 = vsel %vm431, %v598, %v610
        %v629 = vsel %vm431, %v535, %v615
        %v630 = vsel %vm431, %v536, %v616
        %v631 = vsel %vm431, %v567, %v621
        %v632 = vsel %vm431, %v568, %v622
        %v633 = vpack.c.bf16 %v627, %v625
        %v634 = vpack.c.bf16 %v628, %v626
        %v635 = vpack.c.bf16 %v631, %v629
        %v636 = vpack.c.bf16 %v632, %v630
        %v637 = vpack.c.bf16 %v599, %v599
        %v638 = vpack.c.bf16 %v600, %v600
        %v639 = vld [vmem:[%s5] sm:$0x3]
        %v641 = vsel %vm447, %v639, 0
        %v644 = vsel %vm451, %v637, 0
        %v647 = vsel %vm451, %v638, 0
        %649 = vmatprep.subr.bf16.mxu0 %v634
        %650 = vmatpush1.bf16.msra.mxu0 %v633
        %651 = vmatprep.subr.bf16.mxu0 %v636
        %652 = vmatpush1.bf16.msra.mxu0 %v635
        %653 = vmatprep.subr.bf16.mxu0 %v647
        %654 = vmatpush1.bf16.msra.mxu0 %v644
        %655 = vmatprep.subr.bf16.mxu0 0
        %656 = vmatpush1.bf16.msra.mxu0 0
        %657 = vmatprep.subr.bf16.mxu0 0
        %658 = vmatpush1.bf16.msra.mxu0 0
        %659 = vmatprep.subr.bf16.mxu0 0
        %660 = vmatpush1.bf16.msra.mxu0 0
        %661 = vmatprep.subr.bf16.mxu0 0
        %662 = vmatpush1.bf16.msra.mxu0 0
        %663 = vmatprep.subr.bf16.mxu0 0
        %664 = vmatpush1.bf16.msra.mxu0 0
        %665 = vmatprep.subr.bf16.mxu0 0
        %666 = vmatpush1.bf16.msra.mxu0 0
        %667 = vmatprep.subr.bf16.mxu0 0
        %668 = vmatpush1.bf16.msra.mxu0 0
        %669 = vmatprep.subr.bf16.mxu0 0
        %670 = vmatpush1.bf16.msra.mxu0 0
        %671 = vmatprep.subr.bf16.mxu0 0
        %672 = vmatpush1.bf16.msra.mxu0 0
        %673 = vmatprep.subr.bf16.mxu0 0
        %674 = vmatpush1.bf16.msra.mxu0 0
        %675 = vmatprep.subr.bf16.mxu0 0
        %676 = vmatpush1.bf16.msra.mxu0 0
        %677 = vmatprep.subr.bf16.mxu0 0
        %678 = vmatpush1.bf16.msra.mxu0 0
        %679 = vmatprep.subr.bf16.mxu0 0
        %680 = vmatpush1.bf16.msra.mxu0 0
        %681 = vmatprep.mubr.bf16.mxu0 0
        %682 = vmatmul.mubr.bf16.gmra.mrb[0].mxu0 %v641
        %v683 = vpop.f32.mrb[0].mxu0
        %v684 = vadd.f32 0.0, %v683
        %v685 = vpop.f32.mrb[0].mxu0
        %v686 = vadd.f32 0.0, %v685
        %v687 = vpop.f32.mrb[0].mxu0
        %v688 = vpop.f32.mrb[0].mxu0
        %689 = vdwg.mxu0
        %v690 = vsel %vm431, %v684, 0.0
        %v691 = vsel %vm431, %v686, 0.0
        %v692 = vadd.f32 %v690, %v691
        %693 = vadd.xlane.f32.xlu0 %v692
        %v694 = vpop.xlane.xlu0 %693
        %v695 = vmul.f32 %v694, 0.00390625
        %v696 = vsub.f32 %v684, %v695
        %v697 = vsub.f32 %v686, %v695
        %v698 = vmul.f32 %v696, %v696
        %v699 = vmul.f32 %v697, %v697
        %v700 = vsel %vm431, %v698, 0.0
        %v701 = vsel %vm431, %v699, 0.0
        %v702 = vadd.f32 %v700, %v701
        %703 = vadd.xlane.f32.xlu0 %v702
        %v704 = vpop.xlane.xlu0 %703
        %v705 = vmul.f32 %v704, 0.00390625
        %v706 = vadd.f32 %v705, 1e-05
        %v707 = vrsqrt.pop %v706
        %v708 = vmul.f32 %v696, %v707
        %v709 = vmul.f32 %v697, %v707
        %v710 = vld [vmem:[%s6] sm:$0xf]
        %712 = vset.pattern.permute.xlu0 0
        %713 = vperm.xlu0 %712, %v710
        %v714 = vpop.permute.xlu0 %713
        %v716 = vmul.f32 %v708, %v714
        %v717 = vmul.f32 %v709, %v714
        %v718 = vld [vmem:[%s7] sm:$0xf]
        %720 = vset.pattern.permute.xlu0 0
        %721 = vperm.xlu0 %720, %v718
        %v722 = vpop.permute.xlu0 %721
        %v724 = vadd.f32 %v716, %v722
        %v725 = vadd.f32 %v717, %v722
        %v726 = vstv %s319
        %v727 = vmul.f32 %v726, %v724
        %v728 = vmul.f32 %v726, %v725
        %v729 = vadd.f32 %v727, %v320
        %v730 = vadd.f32 %v728, %v322
        %v733 = vcombine.low %v729, %v730
        %735 = vst [vmem:[%s299] sm:$0xff] %v733
        %s736 = sand.u32 %s204, 1
        %s737 = scalar_lea.sflag [#allocation4], %s736
        %s738 = sand.u32 %s204, 1
        %s739 = smul.addr %s738, 8
        %s740 = scalar_lea.vmem [#allocation3], %s739
        // Predicated region
        $region53: #{tpu_custom_call.1} parent=51 // pred_check
          %p741 = pneg %p214
        $region54: #{tpu_custom_call.1} parent=51 // pred_check_branch
          %743 = sbr.rel (%p741) target = $region56
        $region55: #{tpu_custom_call.1} parent=51 // pred_region
          %s745 = ssub.s32 128, 128
          %746 = vsyncadd %s737, %s745
          %s747 = smul.addr %s23, 2
          %s748 = smul.addr %s747, 64
          %s749 = scalar_lea.hbm %s8, %s748
          %s751 = sshll.u32 %s740, 4
          %s752 = int_to_ptr.vmem [resolvable:$true] %s751
          %754 = dma.vmem_to_hbm [thread:$0]  %s752, 128, %s749, %s737
        $region56: #{tpu_custom_call.1} parent=51 // pred_fallthru
          _
      $region52: #{tpu_custom_call.1} parent=5 // pred_fallthru
        _
      %p755 = scmp.le.s32.totalorder 2, %s18
      // Predicated region
      $region57: #{tpu_custom_call.1} parent=5 // pred_check
        %p756 = pneg %p755
      $region58: #{tpu_custom_call.1} parent=5 // pred_check_branch
        %758 = sbr.rel (%p756) target = $region60
      $region59: #{tpu_custom_call.1} parent=5 // pred_region
        %s759 = ssub.s32 %s18, 2
        // Predicated region
        $region61: #{tpu_custom_call.1} parent=59 // pred_check
          %p760 = pneg %p220
        $region62: #{tpu_custom_call.1} parent=59 // pred_check_branch
          %762 = sbr.rel (%p760) target = $region64
        $region63: #{tpu_custom_call.1} parent=59 // pred_region
          %s763 = sand.u32 %s205, 1
          %s764 = scalar_lea.sflag [#allocation4], %s763
          %s765 = sand.u32 %s205, 1
          %s766 = smul.addr %s765, 8
          %s767 = scalar_lea.vmem [#allocation3], %s766
          %768 = dma.done %s764, 128
        $region64: #{tpu_custom_call.1} parent=59 // pred_fallthru
          _
      $region60: #{tpu_custom_call.1} parent=5 // pred_fallthru
        _
    $region6: #{tpu_custom_call.1} parent=1 // loop_footer
      %s22 = sadd.s32 1, %s18
    $region7: #{tpu_custom_call.1} parent=1 // loop_footer_branch
      %17 = sbr.rel target = $region3
    $region8: #{tpu_custom_call.1} parent=1 // loop_exit
      _
    %769 = vsyncpa [#allocation4], 1
    %s770 = scalar_lea.sflag [#allocation4], 1
    %771 = vsyncpa %s770, 1

</llo_original>
